<compile_context>
chip_gen: v6e
topology: v6e:2x2x1
jax: 0.10.0
libtpu: 0.0.40
codegen_flags: <defaults>
</compile_context>

<pallas_src>
import numpy as np
from collections import Counter, OrderedDict

import jax
import jax.numpy as jnp
from jax.experimental import pallas as pl
from jax.experimental.pallas import tpu as pltpu


# ----------------------------------------------------------------------------
# Single fused Pallas kernel: max-fusion over agents + concatenated 1x1 heads.
# Channels on sublanes, spatial (H*W) on lanes.
# ----------------------------------------------------------------------------
def _fuse_and_heads_kernel(bidx_ref, first_ref, last_ref, order_ref,  # prefetch
                           feat_ref, wT_ref, b_ref,                   # inputs
                           out_ref,                                   # output
                           acc_ref):                                  # scratch
    del bidx_ref, order_ref                    # used only by the index_maps
    i = pl.program_id(1)                       # agent index (reduction axis)
    f = feat_ref[0].astype(jnp.float32)        # (C, tile_hw) — upcast if bf16

    # Single select instead of two scf.if branches on the scalar path.
    is_first = first_ref[i] == 1
    acc_ref[...] = jnp.where(is_first, f, jnp.maximum(acc_ref[...], f))

    # On the last agent of a batch: apply the concatenated cls|reg|dir head
    # (1x1 conv == channel matmul + bias) and write the lane-dense result
    # directly to the output block.  The fused feature never hits HBM.
    @pl.when(last_ref[i] == 1)
    def _():
        x = acc_ref[...].astype(wT_ref.dtype)  # bf16 MXU inputs if weights bf16
        y = jnp.dot(wT_ref[...], x, preferred_element_type=jnp.float32)
        out_ref[0] = (y + b_ref[...]).astype(out_ref.dtype)


def fused_max_and_heads(feat_rows, wT, b_col,
                        batch_idx, first_flag, last_flag, order,
                        num_batches, tile_hw):
    """feat_rows: (N_rows, C, HW_pad); wT: (OC_pad, C); b_col: (OC_pad, 1).
    Returns (B, OC_pad, HW_pad) f32 — channel-major concatenated head output."""
    _, C, HWp = feat_rows.shape
    OCp = wT.shape[0]
    N = int(order.shape[0])
    assert HWp % tile_hw == 0
    T = HWp // tile_hw

    return pl.pallas_call(
        _fuse_and_heads_kernel,
        out_shape=jax.ShapeDtypeStruct((num_batches, OCp, HWp), jnp.float32),
        grid_spec=pltpu.PrefetchScalarGridSpec(
            num_scalar_prefetch=4,
            grid=(T, N),                       # agent (reduction) axis last
            in_specs=[
                # agent reorder folded into the index_map -> no jnp.take gather
                pl.BlockSpec((1, C, tile_hw),
                             lambda t, i, b, fs, ls, od: (od[i], 0, t)),
                pl.BlockSpec((OCp, C),
                             lambda t, i, b, fs, ls, od: (0, 0)),
                pl.BlockSpec((OCp, 1),
                             lambda t, i, b, fs, ls, od: (0, 0)),
            ],
            out_specs=pl.BlockSpec((1, OCp, tile_hw),
                                   lambda t, i, b, fs, ls, od: (b[i], 0, t)),
            scratch_shapes=[pltpu.VMEM((C, tile_hw), jnp.float32)],
        ),
        compiler_params=pltpu.CompilerParams(
            # spatial tiles are independent (megacore on v7x); agent axis is an
            # accumulator (output block revisited) -> arbitrary.
            dimension_semantics=("parallel", "arbitrary"),
            vmem_limit_bytes=32 * 1024 * 1024,
        ),
    )(batch_idx, first_flag, last_flag, order, feat_rows, wT, b_col)


def _round_up(x, m):
    return ((x + m - 1) // m) * m


def _choose_tiling(hw, c, oc_pad, bytes_per_elem=4,
                   vmem_budget=24 << 20, max_tile_cap=8192):
    """Pick the spatial (lane) tile.

    Constraints:
      * multiple of 128 lanes (unmasked lane-dense vst on the output);
      * double-buffered feature+output blocks plus the f32 accumulator stay
        under `vmem_budget` (v7x has only 64 MiB physical VMEM);
      * at least 2 tiles whenever hw > 128 so the "parallel" spatial axis can
        shard across both TensorCores on v7x (no-op on v5e/v6e).
    Returns (tile_hw, hw_pad) with hw_pad = tile_hw * num_tiles >= hw; the
    caller zero-pads the spatial axis to hw_pad (no silent VMEM blow-ups for
    awkward BEV sizes).
    """
    per_col = (3 * c + 2 * oc_pad) * bytes_per_elem   # acc + 2x feat + 2x out
    max_tile = max(128, min(max_tile_cap,
                            (vmem_budget // per_col) // 128 * 128))
    n_tiles = max(pl.cdiv(hw, max_tile), 2 if hw > 128 else 1)
    tile_hw = _round_up(pl.cdiv(hw, n_tiles), 128)
    return tile_hw, tile_hw * n_tiles


# ----------------------------------------------------------------------------
# Plain-JAX glue mirroring the PyTorch forward
# ----------------------------------------------------------------------------
def normalize_pairwise_tfm(pairwise_t_matrix, H, W, discrete_ratio, downsample_rate=1):
    # pairwise_t_matrix: (B, L, L, 4, 4) -> (B, L, L, 2, 3) normalized affine
    m = pairwise_t_matrix[..., jnp.array([0, 1]), :][..., jnp.array([0, 1, 3])]
    m = m.at[..., 0, 1].multiply(H / W)
    m = m.at[..., 1, 0].multiply(W / H)
    m = m.at[..., 0, 2].set(m[..., 0, 2] / (downsample_rate * discrete_ratio * W) * 2)
    m = m.at[..., 1, 2].set(m[..., 1, 2] / (downsample_rate * discrete_ratio * H) * 2)
    return m


class HeterHealAdaptAlignerJAX:
    def __init__(self, args, key, use_bf16_heads=False, feature_dtype=jnp.float32):
        # use_bf16_heads=True / feature_dtype=bf16 are recommended on v6e/v7x
        # (MXU-native bf16, halves HBM/VMEM bytes of the HBM-bound kernel);
        # keep f32 defaults for exact parity with the f32 reference.
        self.args = args
        self.modality_name_list = [
            x for x in args.keys() if x.startswith("m") and x[1:].isdigit()
        ]
        self.cav_range = args["lidar_range"]
        self.sensor_type_dict = OrderedDict()
        self.allied = {}
        self.params = {}
        self.head_splits = {}
        self.head_matmul_dtype = jnp.bfloat16 if use_bf16_heads else jnp.float32
        self.feature_dtype = feature_dtype

        k = key
        for modality_name in self.modality_name_list:
            ms = args[modality_name]
            self.sensor_type_dict[modality_name] = ms["sensor_type"]
            self.allied[modality_name] = ms["allied"]
            in_head = ms["in_head"]
            anchor = ms["anchor_number"]
            nbins = ms["dir_args"]["num_bins"]
            # deterministic synthetic weights for the per-modality 1x1 heads
            k, k1, k2, k3, k4, k5, k6 = jax.random.split(k, 7)
            w_cls = jax.random.normal(k1, (in_head, anchor), jnp.float32) * 0.02
            b_cls = jax.random.normal(k2, (anchor,), jnp.float32) * 0.02
            w_reg = jax.random.normal(k3, (in_head, 7 * anchor), jnp.float32) * 0.02
            b_reg = jax.random.normal(k4, (7 * anchor,), jnp.float32) * 0.02
            w_dir = jax.random.normal(k5, (in_head, nbins * anchor), jnp.float32) * 0.02
            b_dir = jax.random.normal(k6, (nbins * anchor,), jnp.float32) * 0.02

            # keep individual params (reference / state_dict parity)
            self.params[f"cls_head_{modality_name}_w"] = w_cls
            self.params[f"cls_head_{modality_name}_b"] = b_cls
            self.params[f"reg_head_{modality_name}_w"] = w_reg
            self.params[f"reg_head_{modality_name}_b"] = b_reg
            self.params[f"dir_head_{modality_name}_w"] = w_dir
            self.params[f"dir_head_{modality_name}_b"] = b_dir

            # concatenated head weights, transposed to (OC, C) and padded only
            # to a multiple of 8 output channels (sublanes) — no 128-lane pad.
            oc_cat = anchor + 7 * anchor + nbins * anchor
            oc_pad = _round_up(oc_cat, 8)
            w_cat = jnp.concatenate([w_cls, w_reg, w_dir], axis=1)      # (C, oc_cat)
            w_cat = jnp.pad(w_cat, ((0, 0), (0, oc_pad - oc_cat)))
            b_cat = jnp.concatenate([b_cls, b_reg, b_dir])
            b_cat = jnp.pad(b_cat, (0, oc_pad - oc_cat)).reshape(oc_pad, 1)
            self.params[f"head_cat_{modality_name}_wT"] = jnp.transpose(
                w_cat).astype(self.head_matmul_dtype)                   # (OCp, C)
            self.params[f"head_cat_{modality_name}_b"] = b_cat          # f32
            self.head_splits[modality_name] = (anchor, 7 * anchor, nbins * anchor)

        shared = args["shared_head"]
        self.fusion_name = shared["fusion_net"]["method"]  # 'max' here
        self.H = self.cav_range[4] - self.cav_range[1]
        self.W = self.cav_range[3] - self.cav_range[0]
        self.fake_voxel_size = 1

    def forward(self, data_dict):
        output_dict = {"pyramid": "collab"}
        agent_modality_list = data_dict["agent_modality_list"]
        affine_matrix = normalize_pairwise_tfm(
            data_dict["pairwise_t_matrix"], self.H, self.W, self.fake_voxel_size
        )
        record_len = data_dict["record_len"]  # static host numpy array
        modality_count_dict = Counter(agent_modality_list)

        # encoder_* / backbone_* are external; aligner_* == identity (see TODO)
        present = [m for m in self.modality_name_list if m in modality_count_dict]
        feats_all = jnp.concatenate(
            [data_dict[f"inputs_{m}"] for m in present], axis=0)   # (N, C, H, W)
        if feats_all.dtype != self.feature_dtype:
            feats_all = feats_all.astype(self.feature_dtype)
        # TODO(synk): camera CenterCrop / depth_supervision outputs not translated

        Nn, C, Hh, Ww = feats_all.shape
        HW = Hh * Ww
        feat_rows = feats_all.reshape(Nn, C, HW)      # free reshape of NCHW

        # row index of each agent inside feats_all (heterogeneous assembly) —
        # passed as scalar prefetch so the reorder happens in the index_map.
        offsets, off = {}, 0
        for m in present:
            offsets[m] = off
            off += modality_count_dict[m]
        counting = {m: 0 for m in present}
        order = []
        for m in agent_modality_list:
            order.append(offsets[m] + counting[m])
            counting[m] += 1
        order = np.asarray(order, np.int32)

        # Host-side per-agent batch bookkeeping (record_len must be static).
        record_len_np = np.asarray(record_len)
        assert np.all(record_len_np > 0), "record_len must be > 0 per batch"
        B = int(record_len_np.shape[0])
        N = int(record_len_np.sum())
        assert N == Nn == len(agent_modality_list)
        batch_idx = np.repeat(np.arange(B), record_len_np).astype(np.int32)
        assert np.all(np.diff(batch_idx) >= 0)  # agents of a batch are contiguous
        starts = np.concatenate([[0], np.cumsum(record_len_np)[:-1]])
        ends = np.cumsum(record_len_np) - 1
        first_flag = np.zeros(N, np.int32)
        first_flag[starts] = 1
        last_flag = np.zeros(N, np.int32)
        last_flag[ends] = 1

        # Heads: the PyTorch code uses the heads of the *last* modality in
        # agent_modality_list (loop-variable leakage) — reproduce that.
        modality_name = agent_modality_list[-1]
        wT = self.params[f"head_cat_{modality_name}_wT"]     # (OCp, C)
        b_col = self.params[f"head_cat_{modality_name}_b"]   # (OCp, 1)
        OCp = wT.shape[0]

        # Spatial (lane) tiling; pad HW to a tile multiple only if misaligned.
        tile_hw, HW_pad = _choose_tiling(HW, C, OCp)
        if HW_pad != HW:
            feat_rows = jnp.pad(feat_rows, ((0, 0), (0, 0), (0, HW_pad - HW)))

        # One fused Pallas pass: shared max fusion + concatenated 1x1 heads.
        head_out = fused_max_and_heads(
            feat_rows, wT, b_col,
            jnp.asarray(batch_idx), jnp.asarray(first_flag),
            jnp.asarray(last_flag), jnp.asarray(order),
            B, tile_hw,
        )  # (B, OC_pad, HW_pad) f32 — channel-major

        occ_outputs = None
        del affine_matrix  # TODO(synk): grid_sample warping only used by pyramid fusion

        a, r, d = self.head_splits[modality_name]

        def take(lo, oc):   # channel slice + free reshape back to NCHW
            return head_out[:, lo:lo + oc, :HW].reshape(B, oc, Hh, Ww)

        cls_preds = take(0, a)
        reg_preds = take(a, r)
        dir_preds = take(a + r, d)

        output_dict.update(
            {
                "cls_preds": cls_preds,
                "reg_preds": reg_preds,
                "dir_preds": dir_preds,
                "occ_single_list": occ_outputs,
            }
        )
        return output_dict


# ----------------------------------------------------------------------------
if __name__ == "__main__":
    key = jax.random.PRNGKey(0)

    C_IN, H, W = 64, 16, 16
    ANCHOR, NBINS = 2, 2
    args = {
        "lidar_range": [-51.2, -51.2, -3, 51.2, 51.2, 1],
        "m1": {
            "sensor_type": "lidar",
            "allied": False,
            "in_head": C_IN,
            "anchor_number": ANCHOR,
            "dir_args": {"num_bins": NBINS},
        },
        "m2": {
            "sensor_type": "lidar",
            "allied": True,
            "in_head": C_IN,
            "anchor_number": ANCHOR,
            "dir_args": {"num_bins": NBINS},
        },
        "shared_head": {
            "fusion_net": {"method": "max"},
            "in_head": C_IN,
            "anchor_number": ANCHOR,
            "dir_args": {"num_bins": NBINS},
        },
    }

    # f32 defaults keep the exact-parity self-test valid; on v6e/v7x flip
    # use_bf16_heads=True / feature_dtype=jnp.bfloat16 and relax tolerances.
    model = HeterHealAdaptAlignerJAX(args, key, use_bf16_heads=False,
                                     feature_dtype=jnp.float32)

    # deterministic synthetic inputs (post encoder/backbone BEV features, NCHW)
    k1, k2, _ = jax.random.split(jax.random.PRNGKey(0), 3)
    feats_m1 = jax.random.normal(k1, (2, C_IN, H, W), jnp.float32)  # 2 m1 agents
    feats_m2 = jax.random.normal(k2, (1, C_IN, H, W), jnp.float32)  # 1 m2 agent
    L = 5
    pairwise_t = jnp.broadcast_to(jnp.eye(4, dtype=jnp.float32), (2, L, L, 4, 4))

    data_dict = {
        "agent_modality_list": ["m1", "m2", "m1"],
        "record_len": np.array([2, 1], dtype=np.int32),
        "pairwise_t_matrix": pairwise_t,
        "inputs_m1": feats_m1,
        "inputs_m2": feats_m2,
    }

    out = model.forward(data_dict)
    jax.block_until_ready(out["cls_preds"])
    jax.block_until_ready(out["reg_preds"])
    jax.block_until_ready(out["dir_preds"])

    # sanity: shapes match PyTorch head conventions (NCHW)
    assert out["cls_preds"].shape == (2, ANCHOR, H, W)
    assert out["reg_preds"].shape == (2, 7 * ANCHOR, H, W)
    assert out["dir_preds"].shape == (2, NBINS * ANCHOR, H, W)

    # cross-check fusion + heads against a pure-JAX reference
    hf = jnp.stack([feats_m1[0], feats_m2[0], feats_m1[1]])        # (3, C, H, W)
    fused_ref = jnp.stack([jnp.maximum(hf[0], hf[1]), hf[2]])      # record_len=[2,1]

    def head_ref(w, b):
        y = jnp.einsum("bchw,co->bohw", fused_ref, w,
                       precision=jax.lax.Precision.HIGHEST)
        return y + b[None, :, None, None]

    # heads of agent_modality_list[-1] == "m1" (loop-variable leakage semantics)
    cls_ref = head_ref(model.params["cls_head_m1_w"], model.params["cls_head_m1_b"])
    reg_ref = head_ref(model.params["reg_head_m1_w"], model.params["reg_head_m1_b"])
    dir_ref = head_ref(model.params["dir_head_m1_w"], model.params["dir_head_m1_b"])

    np.testing.assert_allclose(np.asarray(out["cls_preds"]), np.asarray(cls_ref),
                               rtol=1e-4, atol=1e-4)
    np.testing.assert_allclose(np.asarray(out["reg_preds"]), np.asarray(reg_ref),
                               rtol=1e-4, atol=1e-4)
    np.testing.assert_allclose(np.asarray(out["dir_preds"]), np.asarray(dir_ref),
                               rtol=1e-4, atol=1e-4)

    print("KERNEL_OK")
</pallas_src>

<mosaic_0001>
module attributes {stable_mosaic.version = 11 : i64} {
  func.func @_fuse_and_heads_kernel(%arg0: i32, %arg1: i32, %arg2: memref<3xi32, #tpu.memory_space<smem>>, %arg3: memref<3xi32, #tpu.memory_space<smem>>, %arg4: memref<3xi32, #tpu.memory_space<smem>>, %arg5: memref<3xi32, #tpu.memory_space<smem>>, %arg6: memref<1x64x128xf32, #tpu.memory_space<vmem>>, %arg7: memref<24x64xf32, #tpu.memory_space<vmem>>, %arg8: memref<24x1xf32, #tpu.memory_space<vmem>>, %arg9: memref<1x24x128xf32, #tpu.memory_space<vmem>>, %arg10: memref<64x128xf32, #tpu.memory_space<vmem>>) attributes {dimension_semantics = [#tpu.dimension_semantics<parallel>, #tpu.dimension_semantics<arbitrary>], iteration_bounds = array<i64: 2, 3>, scalar_prefetch = 4 : i64, scratch_operands = 1 : i64, tpu.core_type = #tpu.core_type<tc>, window_params = [{transform_indices = @transform_0, window_bounds = array<i64: 1, 64, 128>}, {pipeline_mode = #tpu.pipeline_mode<synchronous>, transform_indices = @transform_1, window_bounds = array<i64: 24, 64>}, {pipeline_mode = #tpu.pipeline_mode<synchronous>, transform_indices = @transform_2, window_bounds = array<i64: 24, 1>}, {transform_indices = @transform_3, window_bounds = array<i64: 1, 24, 128>}]} {
    %c0 = arith.constant 0 : index
    %c0_0 = arith.constant 0 : index
    %c0_1 = arith.constant 0 : index
    %0 = vector.load %arg6[%c0, %c0_0, %c0_1] : memref<1x64x128xf32, #tpu.memory_space<vmem>>, vector<1x64x128xf32>
    %1 = vector.shape_cast %0 : vector<1x64x128xf32> to vector<64x128xf32>
    %2 = arith.index_cast %arg1 : i32 to index
    %3 = memref.load %arg3[%2] : memref<3xi32, #tpu.memory_space<smem>>
    %c1_i32 = arith.constant 1 : i32
    %4 = arith.cmpi eq, %3, %c1_i32 : i32
    %c0_2 = arith.constant 0 : index
    %c0_3 = arith.constant 0 : index
    %5 = vector.load %arg10[%c0_2, %c0_3] : memref<64x128xf32, #tpu.memory_space<vmem>>, vector<64x128xf32>
    %6 = arith.maximumf %5, %1 : vector<64x128xf32>
    %7 = arith.select %4, %1, %6 : vector<64x128xf32>
    %c0_4 = arith.constant 0 : index
    %c0_5 = arith.constant 0 : index
    %8 = vector.load %arg10[%c0_4, %c0_5] : memref<64x128xf32, #tpu.memory_space<vmem>>, vector<64x128xf32>
    tpu.vector_store %arg10[%c0_4, %c0_5], %7 {strides = array<i32>} : memref<64x128xf32, #tpu.memory_space<vmem>>, vector<64x128xf32>,
    %9 = arith.index_cast %arg1 : i32 to index
    %10 = memref.load %arg4[%9] : memref<3xi32, #tpu.memory_space<smem>>
    %c1_i32_6 = arith.constant 1 : i32
    %11 = arith.cmpi eq, %10, %c1_i32_6 : i32
    %12 = arith.extui %11 : i1 to i32
    %c0_i32 = arith.constant 0 : i32
    %13 = arith.cmpi ne, %12, %c0_i32 : i32
    scf.if %13 {
      %c0_7 = arith.constant 0 : index
      %c0_8 = arith.constant 0 : index
      %14 = vector.load %arg10[%c0_7, %c0_8] : memref<64x128xf32, #tpu.memory_space<vmem>>, vector<64x128xf32>
      %c0_9 = arith.constant 0 : index
      %c0_10 = arith.constant 0 : index
      %15 = vector.load %arg7[%c0_9, %c0_10] : memref<24x64xf32, #tpu.memory_space<vmem>>, vector<24x64xf32>
      %cst = arith.constant dense<0.000000e+00> : vector<24x128xf32>
      %16 = tpu.matmul %15, %14, %cst {dimension_numbers = #tpu.dot_dimension_numbers<[1], [0], [0], [1], [0, 0, 1, 1], [], []>} : vector<24x64xf32>, vector<64x128xf32>, vector<24x128xf32> -> vector<24x128xf32>
      %c0_11 = arith.constant 0 : index
      %c0_12 = arith.constant 0 : index
      %17 = vector.load %arg8[%c0_11, %c0_12] : memref<24x1xf32, #tpu.memory_space<vmem>>, vector<24x1xf32>
      %18 = vector.broadcast %17 : vector<24x1xf32> to vector<24x128xf32>
      %19 = arith.addf %16, %18 : vector<24x128xf32>
      %c0_13 = arith.constant 0 : index
      %c0_14 = arith.constant 0 : index
      %c0_15 = arith.constant 0 : index
      %20 = vector.load %arg9[%c0_13, %c0_14, %c0_15] : memref<1x24x128xf32, #tpu.memory_space<vmem>>, vector<1x24x128xf32>
      %21 = vector.shape_cast %20 : vector<1x24x128xf32> to vector<24x128xf32>
      %22 = vector.shape_cast %19 : vector<24x128xf32> to vector<1x24x128xf32>
      tpu.vector_store %arg9[%c0_13, %c0_14, %c0_15], %22 {strides = array<i32>} : memref<1x24x128xf32, #tpu.memory_space<vmem>>, vector<1x24x128xf32>,
    } else {
    }
    return
  }
  func.func @transform_0(%arg0: i32, %arg1: i32, %arg2: memref<3xi32, #tpu.memory_space<smem>>, %arg3: memref<3xi32, #tpu.memory_space<smem>>, %arg4: memref<3xi32, #tpu.memory_space<smem>>, %arg5: memref<3xi32, #tpu.memory_space<smem>>) -> (i32, i32, i32) {
    %0 = arith.index_cast %arg1 : i32 to index
    %1 = memref.load %arg5[%0] : memref<3xi32, #tpu.memory_space<smem>>
    %c0_i32 = arith.constant 0 : i32
    %c0_i32_0 = arith.constant 0 : i32
    return %1, %c0_i32, %arg0 : i32, i32, i32
  }
  func.func @transform_1(%arg0: i32, %arg1: i32, %arg2: memref<3xi32, #tpu.memory_space<smem>>, %arg3: memref<3xi32, #tpu.memory_space<smem>>, %arg4: memref<3xi32, #tpu.memory_space<smem>>, %arg5: memref<3xi32, #tpu.memory_space<smem>>) -> (i32, i32) {
    %c0_i32 = arith.constant 0 : i32
    %c0_i32_0 = arith.constant 0 : i32
    %c0_i32_1 = arith.constant 0 : i32
    return %c0_i32, %c0_i32_0 : i32, i32
  }
  func.func @transform_2(%arg0: i32, %arg1: i32, %arg2: memref<3xi32, #tpu.memory_space<smem>>, %arg3: memref<3xi32, #tpu.memory_space<smem>>, %arg4: memref<3xi32, #tpu.memory_space<smem>>, %arg5: memref<3xi32, #tpu.memory_space<smem>>) -> (i32, i32) {
    %c0_i32 = arith.constant 0 : i32
    %c0_i32_0 = arith.constant 0 : i32
    %c0_i32_1 = arith.constant 0 : i32
    return %c0_i32, %c0_i32_0 : i32, i32
  }
  func.func @transform_3(%arg0: i32, %arg1: i32, %arg2: memref<3xi32, #tpu.memory_space<smem>>, %arg3: memref<3xi32, #tpu.memory_space<smem>>, %arg4: memref<3xi32, #tpu.memory_space<smem>>, %arg5: memref<3xi32, #tpu.memory_space<smem>>) -> (i32, i32, i32) {
    %0 = arith.index_cast %arg1 : i32 to index
    %1 = memref.load %arg2[%0] : memref<3xi32, #tpu.memory_space<smem>>
    %c0_i32 = arith.constant 0 : i32
    %c0_i32_0 = arith.constant 0 : i32
    return %1, %c0_i32, %arg0 : i32, i32, i32
  }
}

</mosaic_0001>

<llo_original>
// kernel: tpu_custom_call.1
$region0: #{tpu_custom_call.1}
  #allocation0 [shape = 'u32[]', space=smem, size = 0x4, offset = 0x4, fixed_abs, tag = 'smem constant byte address 0x4 - core index']
  #allocation1 [shape = 'u32[144,128]{1,0:T(1,128)}', space=vmem, size = 0x12000, scoped, tag = 'internal scratch']
  #allocation2 [shape = 'f32[64,128]{1,0:T(8,128)}', space=vmem, size = 0x8000, scoped, tag = 'scratch operand']
  #allocation3 [shape = 's32[1]{0}', space=sflag, size = 0x4, scoped, tag = 'scoped memory for tpu_custom_call.1']
  #allocation4 [shape = 'u8[512]{0}', space=smem, size = 0x200, scoped, tag = 'prefetched SMEM operand 0']
  #allocation5 [shape = 'u8[512]{0}', space=smem, size = 0x200, scoped, tag = 'prefetched SMEM operand 1']
  #allocation6 [shape = 'u8[512]{0}', space=smem, size = 0x200, scoped, tag = 'prefetched SMEM operand 2']
  #allocation7 [shape = 'u8[512]{0}', space=smem, size = 0x200, scoped, tag = 'prefetched SMEM operand 3']
  %s0 = inlined_call_operand.vmem [shape: s32[3], index: 0, kind: input, shape index: {}]
  %s1 = inlined_call_operand.vmem [shape: s32[3], index: 1, kind: input, shape index: {}]
  %s2 = inlined_call_operand.vmem [shape: s32[3], index: 2, kind: input, shape index: {}]
  %s3 = inlined_call_operand.vmem [shape: s32[3], index: 3, kind: input, shape index: {}]
  %s4 = inlined_call_operand.hbm [shape: f32[3,64,256], index: 4, kind: input, shape index: {}]
  %s5 = inlined_call_operand.vmem [shape: f32[24,64], index: 5, kind: input, shape index: {}]
  %s6 = inlined_call_operand.vmem [shape: f32[24,1], index: 6, kind: input, shape index: {}]
  %s7 = inlined_call_operand.hbm [shape: f32[2,24,256], index: 7, kind: output, shape index: {}]
  %s8 = sld [smem:[#allocation0]]
  $region53: #{tpu_custom_call.1} parent=0
    _
  %s10 = ssub.s32 1, %s8
  %s11 = scalar_select 0, %s10, %s8
  %s12 = sshll.u32 %s0, 4
  %s13 = int_to_ptr.vmem [resolvable:$true] %s12
  %15 = dma.vmem_to_smem %s13, 16, [#allocation4], [#allocation3]
  %s16 = sshll.u32 %s1, 4
  %s17 = int_to_ptr.vmem [resolvable:$true] %s16
  %19 = dma.vmem_to_smem %s17, 16, [#allocation5], [#allocation3]
  %s20 = sshll.u32 %s2, 4
  %s21 = int_to_ptr.vmem [resolvable:$true] %s20
  %23 = dma.vmem_to_smem %s21, 16, [#allocation6], [#allocation3]
  %s24 = sshll.u32 %s3, 4
  %s25 = int_to_ptr.vmem [resolvable:$true] %s24
  %27 = dma.vmem_to_smem %s25, 16, [#allocation7], [#allocation3]
  %28 = dma.done [#allocation3], 64
  %29 = sfence
  $region1: #{tpu_custom_call.1} parent=0
    #allocation8 [shape = 'u8[65536]{0}', space=vmem, size = 0x10000, scoped, tag = 'input window, operand 4']
    #allocation9 [shape = 's32[2]{0}', space=sflag, size = 0x8, scoped, tag = 'scoped memory for tpu_custom_call.1']
    #allocation10 [shape = 's32[2]{0}', space=sflag, size = 0x8, scoped, tag = 'scoped memory for tpu_custom_call.1']
    #allocation11 [shape = 'u8[24576]{0}', space=vmem, size = 0x6000, scoped, tag = 'output window, operand 0']
    %30 = vsyncpa [#allocation9], 0
    %s31 = scalar_lea.sflag [#allocation9], 1
    %32 = vsyncpa %s31, 0
    %33 = vsyncpa [#allocation10], 0
    %s34 = scalar_lea.sflag [#allocation10], 1
    %35 = vsyncpa %s34, 0
    loop: start=0, step=1, limit=8
    $region2: #{tpu_custom_call.1} parent=1 // loop_pre_header
      _
    $region3: #{tpu_custom_call.1} parent=1 // loop_header
      %s37 = sphi 0, %s41
      %p38 = scmp.ge.s32.totalorder %s37, 8
      %s44 = sphi 0, %s56
      %s45 = sphi 0, %s52
      %s46 = sphi 0, %s44
      %s47 = sphi 0, %s45
      %s48 = sphi 0, %s46
      %s49 = sphi 0, %s47
      %s63 = sphi 0, %s65
      %s66 = sphi 0, %s63
      %s67 = sphi 0, %s66
      %s83 = sphi 0, %s67
      %s87 = sphi 0, %s87
      %s89 = sphi 0, %s87
      %s90 = sphi 0, %s89
      %s104 = sphi 0, %s90
      %s108 = sphi 0, %s108
      %s110 = sphi 0, %s108
      %s111 = sphi 0, %s110
      %s125 = sphi 0, %s111
      %s135 = sphi 0, %s137
      %s138 = sphi 0, %s135
      %s139 = sphi 0, %s138
      %s155 = sphi 0, %s139
    $region4: #{tpu_custom_call.1} parent=1 // loop_header_branch
      %40 = sbr.rel (%p38) target = $region8
    $region5: #{tpu_custom_call.1} parent=1 // loop_body
      %s42 = ssub.s32 %s37, 1
      %s43 = ssub.s32 %s37, 2
      %s50 = sadd.s32 1, %s45
      %p51 = scmp.ge.s32.totalorder %s50, 3
      %s52 = scalar_select %p51, 0, %s50
      %s53 = sadd.s32 1, %s44
      %s54 = scalar_select %p51, %s53, %s44
      %p55 = scmp.ge.s32.totalorder %s54, 2
      %s56 = scalar_select %p55, 0, %s54
      %s57 = sld [smem:[#allocation7 + %s45]]
      %s58 = sld [smem:[#allocation7 + %s52]]
      %s59 = ssub.s32 %s57, %s58
      %s60 = ssub.s32 %s44, %s56
      %s61 = sor.u32 %s59, %s60
      %p62 = scmp.eq.s32.totalorder %s61, 0
      %s64 = sadd.s32 %s63, 1
      %s65 = scalar_select %p62, %s63, %s64
      %p68 = pneg %p62
      %p69 = scmp.eq.s32.totalorder %s37, 5
      %p70 = por %p68, %p69
      %p71 = scmp.ne.s32.totalorder %s63, %s66
      %p72 = scmp.eq.s32.totalorder %s37, 0
      %p73 = por %p71, %p72
      %p74 = scmp.ne.s32.totalorder %s63, %s66
      %p75 = scmp.eq.s32.totalorder %s42, 5
      %p76 = por %p74, %p75
      %p77 = scmp.ne.s32.totalorder %s66, %s67
      %p78 = scmp.eq.s32.totalorder %s42, 0
      %p79 = por %p77, %p78
      %p80 = scmp.ne.s32.totalorder %s66, %s67
      %p81 = scmp.eq.s32.totalorder %s43, 5
      %p82 = por %p80, %p81
      %p84 = scmp.ne.s32.totalorder %s67, %s83
      %p85 = scmp.eq.s32.totalorder %s43, 0
      %p86 = por %p84, %p85
      %s88 = sadd.s32 %s87, 1
      %p91 = scmp.eq.s32.totalorder %s37, 5
      %p92 = scmp.ne.s32.totalorder %s87, %s89
      %p93 = scmp.eq.s32.totalorder %s37, 0
      %p94 = por %p92, %p93
      %p95 = scmp.ne.s32.totalorder %s87, %s89
      %p96 = scmp.eq.s32.totalorder %s42, 5
      %p97 = por %p95, %p96
      %p98 = scmp.ne.s32.totalorder %s89, %s90
      %p99 = scmp.eq.s32.totalorder %s42, 0
      %p100 = por %p98, %p99
      %p101 = scmp.ne.s32.totalorder %s89, %s90
      %p102 = scmp.eq.s32.totalorder %s43, 5
      %p103 = por %p101, %p102
      %p105 = scmp.ne.s32.totalorder %s90, %s104
      %p106 = scmp.eq.s32.totalorder %s43, 0
      %p107 = por %p105, %p106
      %s109 = sadd.s32 %s108, 1
      %p112 = scmp.eq.s32.totalorder %s37, 5
      %p113 = scmp.ne.s32.totalorder %s108, %s110
      %p114 = scmp.eq.s32.totalorder %s37, 0
      %p115 = por %p113, %p114
      %p116 = scmp.ne.s32.totalorder %s108, %s110
      %p117 = scmp.eq.s32.totalorder %s42, 5
      %p118 = por %p116, %p117
      %p119 = scmp.ne.s32.totalorder %s110, %s111
      %p120 = scmp.eq.s32.totalorder %s42, 0
      %p121 = por %p119, %p120
      %p122 = scmp.ne.s32.totalorder %s110, %s111
      %p123 = scmp.eq.s32.totalorder %s43, 5
      %p124 = por %p122, %p123
      %p126 = scmp.ne.s32.totalorder %s111, %s125
      %p127 = scmp.eq.s32.totalorder %s43, 0
      %p128 = por %p126, %p127
      %s129 = sld [smem:[#allocation4 + %s45]]
      %s130 = sld [smem:[#allocation4 + %s52]]
      %s131 = ssub.s32 %s129, %s130
      %s132 = ssub.s32 %s44, %s56
      %s133 = sor.u32 %s131, %s132
      %p134 = scmp.eq.s32.totalorder %s133, 0
      %s136 = sadd.s32 %s135, 1
      %s137 = scalar_select %p134, %s135, %s136
      %p140 = pneg %p134
      %p141 = scmp.eq.s32.totalorder %s37, 5
      %p142 = por %p140, %p141
      %p143 = scmp.ne.s32.totalorder %s135, %s138
      %p144 = scmp.eq.s32.totalorder %s37, 0
      %p145 = por %p143, %p144
      %p146 = scmp.ne.s32.totalorder %s135, %s138
      %p147 = scmp.eq.s32.totalorder %s42, 5
      %p148 = por %p146, %p147
      %p149 = scmp.ne.s32.totalorder %s138, %s139
      %p150 = scmp.eq.s32.totalorder %s42, 0
      %p151 = por %p149, %p150
      %p152 = scmp.ne.s32.totalorder %s138, %s139
      %p153 = scmp.eq.s32.totalorder %s43, 5
      %p154 = por %p152, %p153
      %p156 = scmp.ne.s32.totalorder %s139, %s155
      %p157 = scmp.eq.s32.totalorder %s43, 0
      %p158 = por %p156, %p157
      %p159 = scmp.le.s32.totalorder 1, %s37
      %p160 = scmp.lt.s32.totalorder %s37, 7
      %p161 = pnand %p159, %p160
      %p162 = pneg %p161
      // Predicated region
      $region9: #{tpu_custom_call.1} parent=5 // pred_check
        _
      $region10: #{tpu_custom_call.1} parent=5 // pred_check_branch
        %164 = sbr.rel (%p161) target = $region12
      $region11: #{tpu_custom_call.1} parent=5 // pred_region
        %s165 = ssub.s32 %s37, 1
        // Predicated region
        $region13: #{tpu_custom_call.1} parent=11 // pred_check
          %p166 = pneg %p100
        $region14: #{tpu_custom_call.1} parent=11 // pred_check_branch
          %168 = sbr.rel (%p166) target = $region16
        $region15: #{tpu_custom_call.1} parent=11 // pred_region
          _
        $region16: #{tpu_custom_call.1} parent=11 // pred_fallthru
          _
        // Predicated region
        $region17: #{tpu_custom_call.1} parent=11 // pred_check
          %p169 = pneg %p121
        $region18: #{tpu_custom_call.1} parent=11 // pred_check_branch
          %171 = sbr.rel (%p169) target = $region20
        $region19: #{tpu_custom_call.1} parent=11 // pred_region
          _
        $region20: #{tpu_custom_call.1} parent=11 // pred_fallthru
          _
      $region12: #{tpu_custom_call.1} parent=5 // pred_fallthru
        _
      %p172 = scmp.lt.s32.totalorder %s37, 6
      // Predicated region
      $region21: #{tpu_custom_call.1} parent=5 // pred_check
        %p173 = pneg %p172
      $region22: #{tpu_custom_call.1} parent=5 // pred_check_branch
        %175 = sbr.rel (%p173) target = $region24
      $region23: #{tpu_custom_call.1} parent=5 // pred_region
        // Predicated region
        $region25: #{tpu_custom_call.1} parent=23 // pred_check
          %p176 = pneg %p73
        $region26: #{tpu_custom_call.1} parent=23 // pred_check_branch
          %178 = sbr.rel (%p176) target = $region28
        $region27: #{tpu_custom_call.1} parent=23 // pred_region
          %s179 = sand.u32 %s63, 1
          %s180 = scalar_lea.sflag [#allocation9], %s179
          %s181 = sand.u32 %s63, 1
          %s182 = smul.addr %s181, 64
          %s183 = scalar_lea.vmem [#allocation8], %s182
          %s184 = sld [smem:[#allocation7 + %s45]]
          %s186 = ssub.s32 1024, 1024
          %187 = vsyncadd %s180, %s186
          %s188 = smul.addr %s184, 16
          %s189 = sadd.s32 %s44, %s188
          %s190 = smul.addr %s189, 128
          %s191 = scalar_lea.hbm %s4, %s190
          %s192 = sshll.u32 %s183, 4
          %s193 = int_to_ptr.vmem [resolvable:$true] %s192
          %198 = dma.hbm_to_vmem [thread:$0]  %s191, 1024, %s193, %s180, 256, 128, 8
        $region28: #{tpu_custom_call.1} parent=23 // pred_fallthru
          _
      $region24: #{tpu_custom_call.1} parent=5 // pred_fallthru
        _
      %p199 = scmp.le.s32.totalorder 1, %s37
      %p200 = scmp.lt.s32.totalorder %s37, 7
      %p201 = pnand %p199, %p200
      %p202 = pneg %p201
      // Predicated region
      $region29: #{tpu_custom_call.1} parent=5 // pred_check
        _
      $region30: #{tpu_custom_call.1} parent=5 // pred_check_branch
        %204 = sbr.rel (%p201) target = $region32
      $region31: #{tpu_custom_call.1} parent=5 // pred_region
        %s205 = ssub.s32 %s37, 1
        %s206 = sand.u32 %s66, 1
        %s207 = scalar_lea.sflag [#allocation9], %s206
        %s208 = sand.u32 %s66, 1
        %s209 = smul.addr %s208, 64
        %s210 = scalar_lea.vmem [#allocation8], %s209
        // Predicated region
        $region33: #{tpu_custom_call.1} parent=31 // pred_check
          %p211 = pneg %p79
        $region34: #{tpu_custom_call.1} parent=31 // pred_check_branch
          %213 = sbr.rel (%p211) target = $region36
        $region35: #{tpu_custom_call.1} parent=31 // pred_region
          %214 = dma.done %s207, 1024
        $region36: #{tpu_custom_call.1} parent=31 // pred_fallthru
          _
        %s215 = sand.u32 %s66, 1
        %s216 = scalar_lea.sflag [#allocation9], %s215
        %s217 = sand.u32 %s66, 1
        %s218 = smul.addr %s217, 64
        %s219 = scalar_lea.vmem [#allocation8], %s218
        %p220 = pneg %p79
        %p221 = pneg %p76
        %p222 = pneg %p100
        %p223 = pneg %p97
        %p224 = pneg %p121
        %p225 = pneg %p118
        %p226 = pneg %p151
        %p227 = pneg %p148
        %s228 = sand.u32 %s138, 1
        %s229 = scalar_lea.sflag [#allocation10], %s228
        %s230 = sand.u32 %s138, 1
        %s231 = smul.addr %s230, 24
        %s232 = scalar_lea.vmem [#allocation11], %s231
        %s233 = sld [smem:[#allocation7 + %s47]]
        %s234 = sld [smem:[#allocation4 + %s47]]
        %v235 = vld [vmem:[%s210] sm:$0xff]
        %v236 = vld [vmem:[%s210 + $0x8] sm:$0xff]
        %v237 = vld [vmem:[%s210 + $0x10] sm:$0xff]
        %v238 = vld [vmem:[%s210 + $0x18] sm:$0xff]
        %v239 = vld [vmem:[%s210 + $0x20] sm:$0xff]
        %v240 = vld [vmem:[%s210 + $0x28] sm:$0xff]
        %v241 = vld [vmem:[%s210 + $0x30] sm:$0xff]
        %v242 = vld [vmem:[%s210 + $0x38] sm:$0xff]
        %s243 = sld [smem:[#allocation5 + %s47]]
        %p244 = scmp.eq.s32.totalorder %s243, 1
        %v245 = vld [vmem:[#allocation2] sm:$0xff]
        %v246 = vld [vmem:[#allocation2 + $0x8] sm:$0xff]
        %v247 = vld [vmem:[#allocation2 + $0x10] sm:$0xff]
        %v248 = vld [vmem:[#allocation2 + $0x18] sm:$0xff]
        %v249 = vld [vmem:[#allocation2 + $0x20] sm:$0xff]
        %v250 = vld [vmem:[#allocation2 + $0x28] sm:$0xff]
        %v251 = vld [vmem:[#allocation2 + $0x30] sm:$0xff]
        %v252 = vld [vmem:[#allocation2 + $0x38] sm:$0xff]
        %v253 = vmax.f32 %v245, %v235
        %v254 = vmax.f32 %v246, %v236
        %v255 = vmax.f32 %v247, %v237
        %v256 = vmax.f32 %v248, %v238
        %v257 = vmax.f32 %v249, %v239
        %v258 = vmax.f32 %v250, %v240
        %v259 = vmax.f32 %v251, %v241
        %v260 = vmax.f32 %v252, %v242
        %s261 = scalar_select %p244, 1, 0
        %v262 = vstv %s261
        %vm263 = vcmp.eq.s32.totalorder %v262, 1
        %v264 = vsel %vm263, %v235, %v253
        %v265 = vsel %vm263, %v236, %v254
        %v266 = vsel %vm263, %v237, %v255
        %v267 = vsel %vm263, %v238, %v256
        %v268 = vsel %vm263, %v239, %v257
        %v269 = vsel %vm263, %v240, %v258
        %v270 = vsel %vm263, %v241, %v259
        %v271 = vsel %vm263, %v242, %v260
        %272 = vst [vmem:[#allocation2] sm:$0xff] %v264
        %273 = vst [vmem:[#allocation2 + $0x8] sm:$0xff] %v265
        %274 = vst [vmem:[#allocation2 + $0x10] sm:$0xff] %v266
        %275 = vst [vmem:[#allocation2 + $0x18] sm:$0xff] %v267
        %276 = vst [vmem:[#allocation2 + $0x20] sm:$0xff] %v268
        %277 = vst [vmem:[#allocation2 + $0x28] sm:$0xff] %v269
        %278 = vst [vmem:[#allocation2 + $0x30] sm:$0xff] %v270
        %279 = vst [vmem:[#allocation2 + $0x38] sm:$0xff] %v271
        %s280 = sld [smem:[#allocation6 + %s47]]
        %p281 = scmp.eq.s32.totalorder %s280, 1
        // Predicated region
        $region37: #{tpu_custom_call.1} parent=31 // pred_check
          %p282 = pneg %p281
        $region38: #{tpu_custom_call.1} parent=31 // pred_check_branch
          %284 = sbr.rel (%p282) target = $region40
        $region39: #{tpu_custom_call.1} parent=31 // pred_region
          %v285 = vld [vmem:[#allocation2] sm:$0xff]
          %v286 = vld [vmem:[#allocation2 + $0x8] sm:$0xff]
          %v287 = vld [vmem:[#allocation2 + $0x10] sm:$0xff]
          %v288 = vld [vmem:[#allocation2 + $0x18] sm:$0xff]
          %v289 = vld [vmem:[#allocation2 + $0x20] sm:$0xff]
          %v290 = vld [vmem:[#allocation2 + $0x28] sm:$0xff]
          %v291 = vld [vmem:[#allocation2 + $0x30] sm:$0xff]
          %v292 = vld [vmem:[#allocation2 + $0x38] sm:$0xff]
          %v293 = vld [vmem:[%s5] sm:$0xff]
          %v294 = vld [vmem:[%s5 + $0x8] sm:$0xff]
          %v295 = vld [vmem:[%s5 + $0x10] sm:$0xff]
          %v296 = vld [vmem:[%s6] sm:$0xff]
          %v297 = vld [vmem:[%s6 + $0x8] sm:$0xff]
          %v298 = vld [vmem:[%s6 + $0x10] sm:$0xff]
          %300 = vset.pattern.permute.xlu0 0
          %301 = vperm.xlu0 %300, %v296
          %v302 = vpop.permute.xlu0 %301
          %305 = vset.pattern.permute.xlu0 0
          %306 = vperm.xlu0 %305, %v297
          %v307 = vpop.permute.xlu0 %306
          %310 = vset.pattern.permute.xlu0 0
          %311 = vperm.xlu0 %310, %v298
          %v312 = vpop.permute.xlu0 %311
          %vm314 = vcmask 523264
          %v316 = vsel %vm314, %v293, 0
          %v319 = vsel %vm314, %v294, 0
          %v322 = vsel %vm314, %v295, 0
          %324 = vmatprep.subr.mxu0 0.0
          %325 = vmatpush1.msra.mxu0 0.0
          %326 = vmatprep.subr.mxu0 0.0
          %327 = vmatpush1.msra.mxu0 0.0
          %328 = vmatprep.subr.mxu0 0.0
          %329 = vmatpush1.msra.mxu0 0.0
          %330 = vmatprep.subr.mxu0 0.0
          %331 = vmatpush1.msra.mxu0 0.0
          %332 = vmatprep.subr.mxu0 0.0
          %333 = vmatpush1.msra.mxu0 0.0
          %334 = vmatprep.subr.mxu0 0.0
          %335 = vmatpush1.msra.mxu0 0.0
          %336 = vmatprep.subr.mxu0 0.0
          %337 = vmatpush1.msra.mxu0 0.0
          %338 = vmatprep.subr.mxu0 0.0
          %339 = vmatpush1.msra.mxu0 0.0
          %340 = vmatprep.subr.mxu0 0.0
          %341 = vmatpush1.msra.mxu0 %v292
          %342 = vmatprep.subr.mxu0 0.0
          %343 = vmatpush1.msra.mxu0 %v291
          %344 = vmatprep.subr.mxu0 0.0
          %345 = vmatpush1.msra.mxu0 %v290
          %346 = vmatprep.subr.mxu0 0.0
          %347 = vmatpush1.msra.mxu0 %v289
          %348 = vmatprep.subr.mxu0 0.0
          %349 = vmatpush1.msra.mxu0 %v288
          %350 = vmatprep.subr.mxu0 0.0
          %351 = vmatpush1.msra.mxu0 %v287
          %352 = vmatprep.subr.mxu0 0.0
          %353 = vmatpush1.msra.mxu0 %v286
          %354 = vmatprep.subr.mxu0 0.0
          %355 = vmatpush1.msra.mxu0 %v285
          %356 = vmatprep.subr.mxu0 0.0
          %357 = vmatpush2.msra.mxu0 0.0
          %358 = vmatprep.subr.mxu0 0.0
          %359 = vmatpush2.msra.mxu0 0.0
          %360 = vmatprep.subr.mxu0 0.0
          %361 = vmatpush2.msra.mxu0 0.0
          %362 = vmatprep.subr.mxu0 0.0
          %363 = vmatpush2.msra.mxu0 0.0
          %364 = vmatprep.subr.mxu0 0.0
          %365 = vmatpush2.msra.mxu0 0.0
          %366 = vmatprep.subr.mxu0 0.0
          %367 = vmatpush2.msra.mxu0 0.0
          %368 = vmatprep.subr.mxu0 0.0
          %369 = vmatpush2.msra.mxu0 0.0
          %370 = vmatprep.subr.mxu0 0.0
          %371 = vmatpush2.msra.mxu0 0.0
          %372 = vmatprep.subr.mxu0 0.0
          %373 = vmatpush2.msra.mxu0 0.0
          %374 = vmatprep.subr.mxu0 0.0
          %375 = vmatpush2.msra.mxu0 0.0
          %376 = vmatprep.subr.mxu0 0.0
          %377 = vmatpush2.msra.mxu0 0.0
          %378 = vmatprep.subr.mxu0 0.0
          %379 = vmatpush2.msra.mxu0 0.0
          %380 = vmatprep.subr.mxu0 0.0
          %381 = vmatpush2.msra.mxu0 0.0
          %382 = vmatprep.subr.mxu0 0.0
          %383 = vmatpush2.msra.mxu0 0.0
          %384 = vmatprep.subr.mxu0 0.0
          %385 = vmatpush2.msra.mxu0 0.0
          %386 = vmatprep.subr.mxu0 0.0
          %387 = vmatpush2.msra.mxu0 0.0
          %388 = vmatprep.mubr.f32.mxu0 0.0
          %389 = vmatmul.mubr.f32.gmra.mxu0 %v316
          %v390 = vpop.f32.mrf.mxu0
          %v391 = vadd.f32 %v302, %v390
          %v392 = vpop.f32.mrf.mxu0
          %393 = vmatprep.mubr.f32.mxu0 0.0
          %394 = vmatmul.mubr.f32.gmra.mxu0 %v319
          %v395 = vpop.f32.mrf.mxu0
          %v396 = vadd.f32 %v307, %v395
          %v397 = vpop.f32.mrf.mxu0
          %398 = vmatprep.mubr.f32.mxu0 0.0
          %399 = vmatmul.mubr.f32.gmra.mxu0 %v322
          %v400 = vpop.f32.mrf.mxu0
          %v401 = vadd.f32 %v312, %v400
          %v402 = vpop.f32.mrf.mxu0
          %403 = vdwg.mxu0
          %404 = vst [vmem:[%s232] sm:$0xff] %v391
          %405 = vst [vmem:[%s232 + $0x8] sm:$0xff] %v396
          %406 = vst [vmem:[%s232 + $0x10] sm:$0xff] %v401
        $region40: #{tpu_custom_call.1} parent=31 // pred_fallthru
          _
        %s407 = sand.u32 %s138, 1
        %s408 = scalar_lea.sflag [#allocation10], %s407
        %s409 = sand.u32 %s138, 1
        %s410 = smul.addr %s409, 24
        %s411 = scalar_lea.vmem [#allocation11], %s410
        // Predicated region
        $region41: #{tpu_custom_call.1} parent=31 // pred_check
          %p412 = pneg %p148
        $region42: #{tpu_custom_call.1} parent=31 // pred_check_branch
          %414 = sbr.rel (%p412) target = $region44
        $region43: #{tpu_custom_call.1} parent=31 // pred_region
          %s415 = sld [smem:[#allocation4 + %s47]]
          %s417 = ssub.s32 384, 384
          %418 = vsyncadd %s408, %s417
          %s419 = smul.addr %s415, 6
          %s420 = sadd.s32 %s46, %s419
          %s421 = smul.addr %s420, 128
          %s422 = scalar_lea.hbm %s7, %s421
          %s423 = sshll.u32 %s411, 4
          %s424 = int_to_ptr.vmem [resolvable:$true] %s423
          %429 = dma.vmem_to_hbm [thread:$0]  %s424, 384, %s422, %s408, 128, 256, 8
        $region44: #{tpu_custom_call.1} parent=31 // pred_fallthru
          _
      $region32: #{tpu_custom_call.1} parent=5 // pred_fallthru
        _
      %p430 = scmp.le.s32.totalorder 2, %s37
      // Predicated region
      $region45: #{tpu_custom_call.1} parent=5 // pred_check
        %p431 = pneg %p430
      $region46: #{tpu_custom_call.1} parent=5 // pred_check_branch
        %433 = sbr.rel (%p431) target = $region48
      $region47: #{tpu_custom_call.1} parent=5 // pred_region
        %s434 = ssub.s32 %s37, 2
        // Predicated region
        $region49: #{tpu_custom_call.1} parent=47 // pred_check
          %p435 = pneg %p154
        $region50: #{tpu_custom_call.1} parent=47 // pred_check_branch
          %437 = sbr.rel (%p435) target = $region52
        $region51: #{tpu_custom_call.1} parent=47 // pred_region
          %s438 = sand.u32 %s139, 1
          %s439 = scalar_lea.sflag [#allocation10], %s438
          %s440 = sand.u32 %s139, 1
          %s441 = smul.addr %s440, 24
          %s442 = scalar_lea.vmem [#allocation11], %s441
          %443 = dma.done %s439, 384
        $region52: #{tpu_custom_call.1} parent=47 // pred_fallthru
          _
      $region48: #{tpu_custom_call.1} parent=5 // pred_fallthru
        _
    $region6: #{tpu_custom_call.1} parent=1 // loop_footer
      %s41 = sadd.s32 1, %s37
    $region7: #{tpu_custom_call.1} parent=1 // loop_footer_branch
      %36 = sbr.rel target = $region3
    $region8: #{tpu_custom_call.1} parent=1 // loop_exit
      _
    %444 = vsyncpa [#allocation9], 1
    %s445 = scalar_lea.sflag [#allocation9], 1
    %446 = vsyncpa %s445, 1
    %447 = vsyncpa [#allocation10], 1
    %s448 = scalar_lea.sflag [#allocation10], 1
    %449 = vsyncpa %s448, 1

</llo_original>
